<compile_context>
chip_gen: v7x
topology: tpu7x:2x2x1
jax: 0.10.0
libtpu: 0.0.40
codegen_flags: <defaults>
</compile_context>

<pallas_src>
import functools

import jax
import jax.numpy as jnp
from jax import lax
from jax.experimental import pallas as pl
from jax.experimental.pallas import tpu as pltpu


def _round_up(v, m):
    return ((v + m - 1) // m) * m


def _causal_flow_kernel(x_ref, slab_ref, o_ref, *, enc_meta, dec_meta,
                        state_dim, n_keep, compute_dtype):
    """Fused CausalFlowModel forward for one batch tile.

    x_ref    : (tb, state_dim)     raw state, batch-major (as the model receives it)
    slab_ref : (rows, k_max + 1)   all layer weights + bias columns, packed, 8-row aligned
    o_ref    : (tb, n_keep)        output[:, :state_dim]

    Activations are kept feature-major (feat, tb) so the large batch axis rides the
    128-lane axis; weights stay in PyTorch [out, in] layout so every hidden layer is a
    plain MXU matmul  h = W @ h + b  with f32 accumulation.
    """
    slab = slab_ref[...]
    x = x_ref[...].astype(compute_dtype)                     # (tb, sd)
    # Contract W's `k` axis against x's feature axis (trans_b form) -> (n, tb);
    # avoids materialising x^T.
    dn_xt = (((1,), (1,)), ((), ()))

    def wb(meta_entry, n_rows=None):
        r0, n, k = meta_entry
        rows = n if n_rows is None else n_rows
        w = slab[r0:r0 + rows, 0:k].astype(compute_dtype)
        b = slab[r0:r0 + rows, k:k + 1].astype(jnp.float32)  # (rows, 1): broadcasts over lanes
        return w, b

    # ---------------- encoder: h0 = x_dnn(x) ----------------
    w, b = wb(enc_meta[0])
    h = jnp.tanh(lax.dot_general(w, x, dn_xt, preferred_element_type=jnp.float32) + b)
    for li in range(1, len(enc_meta) - 1):
        w, b = wb(enc_meta[li])
        h = jnp.tanh(jnp.dot(w, h.astype(compute_dtype),
                             preferred_element_type=jnp.float32) + b)
    w, b = wb(enc_meta[-1])                                   # final encoder layer: no tanh
    h0 = jnp.dot(w, h.astype(compute_dtype), preferred_element_type=jnp.float32) + b

    # ------- decoder: u_dnn(torch.cat((x, h0), dim=1)) -------
    # The concat never materialises: the first decoder matmul is split (exactly) as
    #   W @ [x ; h0] = W[:, :sd] @ x^T + W[:, sd:] @ h0   (x rows are already resident).
    w, b = wb(dec_meta[0])
    h = jnp.tanh(
        lax.dot_general(w[:, :state_dim], x, dn_xt, preferred_element_type=jnp.float32)
        + jnp.dot(w[:, state_dim:], h0.astype(compute_dtype),
                  preferred_element_type=jnp.float32)
        + b)
    for li in range(1, len(dec_meta) - 1):
        w, b = wb(dec_meta[li])
        h = jnp.tanh(jnp.dot(w, h.astype(compute_dtype),
                             preferred_element_type=jnp.float32) + b)

    # Last decoder layer: use the slab's zero padding to round the output rows up to a
    # sublane multiple, so the final feature-major -> batch-major flip is a clean
    # (8k, tb) -> (tb, 8k) XLU transpose; padded rows are exactly zero and sliced off.
    n_last = dec_meta[-1][1]
    w, b = wb(dec_meta[-1], n_rows=_round_up(n_last, 8))
    out_ft = jnp.dot(w, h.astype(compute_dtype), preferred_element_type=jnp.float32) + b
    o_ref[...] = out_ft.T[:, :n_keep].astype(o_ref.dtype)    # == output[:, :state_dim]


def pack_params_slab(enc_params, dec_params, dtype=jnp.float32):
    """Pack every layer's [W | b] into one sublane-aligned slab (single kernel operand).

    Each layer's block starts at an 8-aligned row offset and is round_up(out, 8) rows
    tall (padding rows are zero); columns 0..k-1 hold W ([out, in] torch layout) and
    column k holds the bias.  Returns (slab, enc_meta, dec_meta) with static
    (row_offset, out, in) tuples for in-kernel slicing.  Pre-cast to bf16 here
    (wrapper-side) for v6e/v7x MXU headroom; keep f32 on v5e.
    """
    enc_params, dec_params = list(enc_params), list(dec_params)
    all_p = enc_params + dec_params
    cols = max(int(w.shape[1]) for w, _ in all_p) + 1
    blocks, meta, r = [], [], 0
    for w, b in all_p:
        n, k = int(w.shape[0]), int(w.shape[1])
        n8 = _round_up(n, 8)
        blk = jnp.zeros((n8, cols), jnp.float32)
        blk = blk.at[:n, :k].set(w.astype(jnp.float32))
        blk = blk.at[:n, k].set(b.astype(jnp.float32))
        blocks.append(blk)
        meta.append((r, n, k))
        r += n8
    slab = jnp.concatenate(blocks, axis=0).astype(dtype)
    ne = len(enc_params)
    return slab, tuple(meta[:ne]), tuple(meta[ne:])


def causal_flow_forward(x, slab, enc_meta, dec_meta, *, state_dim, tb_cap=1024):
    """CausalFlowModel forward (encoder -> concat -> decoder -> [:, :state_dim]) in one
    pallas_call.  x: [B, state_dim] f32.  Returns [B, min(state_dim, output_dim)].

    # TODO(synk): the custom LSTM u_rnn (tau-leaky, state_dim arg, packed sequences),
    # pad_packed_sequence, the deltas interpolation and the h_lens-1 gather have no
    # class definition in the spec; the decoder is fed h0_stack (what h_shift[:, 0, :]
    # holds in the original forward), matching the previous version's simplification.
    """
    B, sd = x.shape
    assert sd == state_dim
    out_dim = dec_meta[-1][1]
    n_keep = min(state_dim, out_dim)

    # Single grid step whenever the whole batch fits (grid steps are a serial loop on
    # 1-TC chips, ~0.35us bookkeeping each); tile only large batches.
    tb = B if B <= tb_cap else tb_cap
    grid = (pl.cdiv(B, tb),)

    kernel = functools.partial(
        _causal_flow_kernel, enc_meta=enc_meta, dec_meta=dec_meta,
        state_dim=state_dim, n_keep=n_keep, compute_dtype=slab.dtype)

    return pl.pallas_call(
        kernel,
        out_shape=jax.ShapeDtypeStruct((B, n_keep), x.dtype),
        grid=grid,
        in_specs=[
            pl.BlockSpec((tb, sd), lambda i: (i, 0)),          # batch tile of x
            pl.BlockSpec(slab.shape, lambda i: (0, 0)),        # whole param slab, VMEM-resident
        ],
        out_specs=pl.BlockSpec((tb, n_keep), lambda i: (i, 0)),
        compiler_params=pltpu.CompilerParams(
            dimension_semantics=("parallel",),                 # batch tiles shard across TCs (v7x)
        ),
    )(x, slab)


def init_ffnet_params(key, in_size, out_size, hidden_size):
    """PyTorch nn.Linear default init (U(-1/sqrt(fan_in), +1/sqrt(fan_in))), [out, in] layout."""
    sizes = [in_size] + list(hidden_size) + [out_size]
    params = []
    for isz, osz in zip(sizes[:-1], sizes[1:]):
        key, kw, kb = jax.random.split(key, 3)
        bound = 1.0 / jnp.sqrt(jnp.float32(isz))
        w = jax.random.uniform(kw, (osz, isz), jnp.float32, -bound, bound)
        b = jax.random.uniform(kb, (osz,), jnp.float32, -bound, bound)
        params.append((w, b))
    return params


def ffnet_reference(x, params):
    n = len(params)
    for li, (w, b) in enumerate(params):
        x = x @ w.T + b
        if li < n - 1:
            x = jnp.tanh(x)
    return x


if __name__ == "__main__":
    # Sizes from CausalFlowModel's documented config:
    # state_dim=2, control_dim=1, output_dim=2, control_rnn_size=8, control_rnn_depth=1,
    # encoder_size=1, encoder_depth=2, decoder_size=1, decoder_depth=2, batch=128.
    state_dim, control_rnn_size, control_rnn_depth, output_dim = 2, 8, 1, 2
    encoder_size, encoder_depth, decoder_size, decoder_depth = 1, 2, 1, 2
    batch = 128

    x_dnn_osz = control_rnn_size * control_rnn_depth            # 8
    u_dnn_isz = control_rnn_size + state_dim                     # 10 (mode=True)

    key = jax.random.PRNGKey(0)
    kx, ke, kd = jax.random.split(key, 3)
    x = jax.random.normal(kx, (batch, state_dim), jnp.float32)
    enc_params = init_ffnet_params(ke, state_dim, x_dnn_osz,
                                   encoder_depth * (encoder_size * x_dnn_osz,))
    dec_params = init_ffnet_params(kd, u_dnn_isz, output_dim,
                                   decoder_depth * (decoder_size * u_dnn_isz,))

    # Pack once: single [rows, k_max+1] operand holding every W and bias.
    slab, enc_meta, dec_meta = pack_params_slab(enc_params, dec_params, jnp.float32)

    # --- fused forward: x_dnn -> cat(x, h0) -> u_dnn -> [:, :state_dim], one kernel ---
    out = causal_flow_forward(x, slab, enc_meta, dec_meta, state_dim=state_dim)
    out = jax.block_until_ready(out)

    # Pure-jnp reference for the same pipeline (f32, strict tolerance).
    h0_ref = ffnet_reference(x, enc_params)
    ref = ffnet_reference(jnp.concatenate([x, h0_ref], axis=1), dec_params)[:, :state_dim]
    assert out.shape == (batch, state_dim)
    assert jnp.allclose(out, ref, atol=1e-5, rtol=1e-5), "mismatch vs reference (f32, grid=1)"

    # Tiled-grid path (batch split across grid steps / v7x TCs) — identical numerics.
    out_tiled = causal_flow_forward(x, slab, enc_meta, dec_meta,
                                    state_dim=state_dim, tb_cap=64)
    out_tiled = jax.block_until_ready(out_tiled)
    assert jnp.allclose(out_tiled, ref, atol=1e-5, rtol=1e-5), "mismatch vs reference (tiled)"

    # bf16 MXU-input path (v6e/v7x): weights pre-cast wrapper-side, f32 accumulation.
    slab_bf16, _, _ = pack_params_slab(enc_params, dec_params, jnp.bfloat16)
    out_bf16 = causal_flow_forward(x, slab_bf16, enc_meta, dec_meta, state_dim=state_dim)
    out_bf16 = jax.block_until_ready(out_bf16)
    assert jnp.allclose(out_bf16, ref, atol=5e-2, rtol=5e-2), "mismatch vs reference (bf16)"

    print("KERNEL_OK")
</pallas_src>

<mosaic_0001>
module attributes {stable_mosaic.version = 11 : i64} {
  func.func @_causal_flow_kernel(%arg0: i32, %arg1: memref<128x2xf32, #tpu.memory_space<vmem>>, %arg2: memref<64x11xf32, #tpu.memory_space<vmem>>, %arg3: memref<128x2xf32, #tpu.memory_space<vmem>>) attributes {dimension_semantics = [#tpu.dimension_semantics<parallel>], iteration_bounds = array<i64: 1>, scalar_prefetch = 0 : i64, scratch_operands = 0 : i64, tpu.core_type = #tpu.core_type<tc>, window_params = [{transform_indices = @transform_0, window_bounds = array<i64: 128, 2>}, {pipeline_mode = #tpu.pipeline_mode<synchronous>, transform_indices = @transform_1, window_bounds = array<i64: 64, 11>}, {transform_indices = @transform_2, window_bounds = array<i64: 128, 2>}]} {
    %c0 = arith.constant 0 : index
    %c0_0 = arith.constant 0 : index
    %0 = vector.load %arg2[%c0, %c0_0] : memref<64x11xf32, #tpu.memory_space<vmem>>, vector<64x11xf32>
    %c0_1 = arith.constant 0 : index
    %c0_2 = arith.constant 0 : index
    %1 = vector.load %arg1[%c0_1, %c0_2] : memref<128x2xf32, #tpu.memory_space<vmem>>, vector<128x2xf32>
    %2 = vector.extract_strided_slice %0 {offsets = [0, 0], sizes = [8, 2], strides = [1, 1]} : vector<64x11xf32> to vector<8x2xf32>
    %3 = vector.extract_strided_slice %0 {offsets = [0, 2], sizes = [8, 1], strides = [1, 1]} : vector<64x11xf32> to vector<8x1xf32>
    %cst = arith.constant dense<0.000000e+00> : vector<8x128xf32>
    %4 = tpu.matmul %2, %1, %cst {dimension_numbers = #tpu.dot_dimension_numbers<[1], [1], [0], [0], [0, 0, 1, 0], [], []>} : vector<8x2xf32>, vector<128x2xf32>, vector<8x128xf32> -> vector<8x128xf32>
    %5 = vector.broadcast %3 : vector<8x1xf32> to vector<8x128xf32>
    %6 = arith.addf %4, %5 : vector<8x128xf32>
    %7 = math.tanh %6 : vector<8x128xf32>
    %8 = vector.extract_strided_slice %0 {offsets = [8, 0], sizes = [8, 8], strides = [1, 1]} : vector<64x11xf32> to vector<8x8xf32>
    %9 = vector.extract_strided_slice %0 {offsets = [8, 8], sizes = [8, 1], strides = [1, 1]} : vector<64x11xf32> to vector<8x1xf32>
    %cst_3 = arith.constant dense<0.000000e+00> : vector<8x128xf32>
    %10 = tpu.matmul %8, %7, %cst_3 {dimension_numbers = #tpu.dot_dimension_numbers<[1], [0], [0], [1], [0, 0, 1, 1], [], []>} : vector<8x8xf32>, vector<8x128xf32>, vector<8x128xf32> -> vector<8x128xf32>
    %11 = vector.broadcast %9 : vector<8x1xf32> to vector<8x128xf32>
    %12 = arith.addf %10, %11 : vector<8x128xf32>
    %13 = math.tanh %12 : vector<8x128xf32>
    %14 = vector.extract_strided_slice %0 {offsets = [16, 0], sizes = [8, 8], strides = [1, 1]} : vector<64x11xf32> to vector<8x8xf32>
    %15 = vector.extract_strided_slice %0 {offsets = [16, 8], sizes = [8, 1], strides = [1, 1]} : vector<64x11xf32> to vector<8x1xf32>
    %cst_4 = arith.constant dense<0.000000e+00> : vector<8x128xf32>
    %16 = tpu.matmul %14, %13, %cst_4 {dimension_numbers = #tpu.dot_dimension_numbers<[1], [0], [0], [1], [0, 0, 1, 1], [], []>} : vector<8x8xf32>, vector<8x128xf32>, vector<8x128xf32> -> vector<8x128xf32>
    %17 = vector.broadcast %15 : vector<8x1xf32> to vector<8x128xf32>
    %18 = arith.addf %16, %17 : vector<8x128xf32>
    %19 = vector.extract_strided_slice %0 {offsets = [24, 0], sizes = [10, 10], strides = [1, 1]} : vector<64x11xf32> to vector<10x10xf32>
    %20 = vector.extract_strided_slice %0 {offsets = [24, 10], sizes = [10, 1], strides = [1, 1]} : vector<64x11xf32> to vector<10x1xf32>
    %21 = vector.extract_strided_slice %19 {offsets = [0, 0], sizes = [10, 2], strides = [1, 1]} : vector<10x10xf32> to vector<10x2xf32>
    %cst_5 = arith.constant dense<0.000000e+00> : vector<10x128xf32>
    %22 = tpu.matmul %21, %1, %cst_5 {dimension_numbers = #tpu.dot_dimension_numbers<[1], [1], [0], [0], [0, 0, 1, 0], [], []>} : vector<10x2xf32>, vector<128x2xf32>, vector<10x128xf32> -> vector<10x128xf32>
    %23 = vector.extract_strided_slice %19 {offsets = [0, 2], sizes = [10, 8], strides = [1, 1]} : vector<10x10xf32> to vector<10x8xf32>
    %cst_6 = arith.constant dense<0.000000e+00> : vector<10x128xf32>
    %24 = tpu.matmul %23, %18, %cst_6 {dimension_numbers = #tpu.dot_dimension_numbers<[1], [0], [0], [1], [0, 0, 1, 1], [], []>} : vector<10x8xf32>, vector<8x128xf32>, vector<10x128xf32> -> vector<10x128xf32>
    %25 = arith.addf %22, %24 : vector<10x128xf32>
    %26 = vector.broadcast %20 : vector<10x1xf32> to vector<10x128xf32>
    %27 = arith.addf %25, %26 : vector<10x128xf32>
    %28 = math.tanh %27 : vector<10x128xf32>
    %29 = vector.extract_strided_slice %0 {offsets = [40, 0], sizes = [10, 10], strides = [1, 1]} : vector<64x11xf32> to vector<10x10xf32>
    %30 = vector.extract_strided_slice %0 {offsets = [40, 10], sizes = [10, 1], strides = [1, 1]} : vector<64x11xf32> to vector<10x1xf32>
    %cst_7 = arith.constant dense<0.000000e+00> : vector<10x128xf32>
    %31 = tpu.matmul %29, %28, %cst_7 {dimension_numbers = #tpu.dot_dimension_numbers<[1], [0], [0], [1], [0, 0, 1, 1], [], []>} : vector<10x10xf32>, vector<10x128xf32>, vector<10x128xf32> -> vector<10x128xf32>
    %32 = vector.broadcast %30 : vector<10x1xf32> to vector<10x128xf32>
    %33 = arith.addf %31, %32 : vector<10x128xf32>
    %34 = math.tanh %33 : vector<10x128xf32>
    %35 = vector.extract_strided_slice %0 {offsets = [56, 0], sizes = [8, 10], strides = [1, 1]} : vector<64x11xf32> to vector<8x10xf32>
    %36 = vector.extract_strided_slice %0 {offsets = [56, 10], sizes = [8, 1], strides = [1, 1]} : vector<64x11xf32> to vector<8x1xf32>
    %cst_8 = arith.constant dense<0.000000e+00> : vector<8x128xf32>
    %37 = tpu.matmul %35, %34, %cst_8 {dimension_numbers = #tpu.dot_dimension_numbers<[1], [0], [0], [1], [0, 0, 1, 1], [], []>} : vector<8x10xf32>, vector<10x128xf32>, vector<8x128xf32> -> vector<8x128xf32>
    %38 = vector.broadcast %36 : vector<8x1xf32> to vector<8x128xf32>
    %39 = arith.addf %37, %38 : vector<8x128xf32>
    %40 = tpu.transpose %39, [1, 0] : vector<8x128xf32> -> vector<128x8xf32>
    %41 = vector.extract_strided_slice %40 {offsets = [0, 0], sizes = [128, 2], strides = [1, 1]} : vector<128x8xf32> to vector<128x2xf32>
    %c0_9 = arith.constant 0 : index
    %c0_10 = arith.constant 0 : index
    %42 = vector.load %arg3[%c0_9, %c0_10] : memref<128x2xf32, #tpu.memory_space<vmem>>, vector<128x2xf32>
    tpu.vector_store %arg3[%c0_9, %c0_10], %41 {strides = array<i32>} : memref<128x2xf32, #tpu.memory_space<vmem>>, vector<128x2xf32>,
    return
  }
  func.func @transform_0(%arg0: i32) -> (i32, i32) {
    %c0_i32 = arith.constant 0 : i32
    %c0_i32_0 = arith.constant 0 : i32
    return %arg0, %c0_i32 : i32, i32
  }
  func.func @transform_1(%arg0: i32) -> (i32, i32) {
    %c0_i32 = arith.constant 0 : i32
    %c0_i32_0 = arith.constant 0 : i32
    %c0_i32_1 = arith.constant 0 : i32
    return %c0_i32, %c0_i32_0 : i32, i32
  }
  func.func @transform_2(%arg0: i32) -> (i32, i32) {
    %c0_i32 = arith.constant 0 : i32
    %c0_i32_0 = arith.constant 0 : i32
    return %arg0, %c0_i32 : i32, i32
  }
}

</mosaic_0001>

<llo_original>
// kernel: tpu_custom_call.1
$region0: #{tpu_custom_call.1}
  #allocation0 [shape = 'u32[]', space=smem, size = 0x4, offset = 0x4, fixed_abs, tag = 'smem constant byte address 0x4 - core index']
  #allocation1 [shape = 'u32[144,128]{1,0:T(1,128)}', space=vmem, size = 0x12000, scoped, tag = 'internal scratch']
  %s0 = inlined_call_operand.vmem [shape: f32[128,2], index: 0, kind: input, shape index: {}]
  %s1 = inlined_call_operand.vmem [shape: f32[64,11], index: 1, kind: input, shape index: {}]
  %s2 = inlined_call_operand.vmem [shape: f32[128,2], index: 2, kind: output, shape index: {}]
  %s3 = sld [smem:[#allocation0]]
  $region18: #{tpu_custom_call.1} parent=0
    _
  %s5 = ssub.s32 1, %s3
  %s6 = scalar_select 0, %s5, %s3
  // Predicated region
  $region2: #{tpu_custom_call.1} parent=0 // pred_check
    _
  $region3: #{tpu_custom_call.1} parent=0 // pred_check_branch
    %8 = sbr.rel (0) target = $region5
  $region4: #{tpu_custom_call.1} parent=0 // pred_region
    _
  $region5: #{tpu_custom_call.1} parent=0 // pred_fallthru
    _
  // Predicated region
  $region6: #{tpu_custom_call.1} parent=0 // pred_check
    _
  $region7: #{tpu_custom_call.1} parent=0 // pred_check_branch
    %10 = sbr.rel (0) target = $region9
  $region8: #{tpu_custom_call.1} parent=0 // pred_region
    _
  $region9: #{tpu_custom_call.1} parent=0 // pred_fallthru
    _
  %v11 = vld [vmem:[%s1] sm:$0xff]
  %v12 = vld [vmem:[%s1 + $0x8] sm:$0xff]
  %v13 = vld [vmem:[%s1 + $0x10] sm:$0xff]
  %v14 = vld [vmem:[%s1 + $0x18] sm:$0xff]
  %v15 = vld [vmem:[%s1 + $0x20] sm:$0xff]
  %v16 = vld [vmem:[%s1 + $0x28] sm:$0xff]
  %v17 = vld [vmem:[%s1 + $0x30] sm:$0xff]
  %v18 = vld [vmem:[%s1 + $0x38] sm:$0xff]
  %v19 = vld [vmem:[%s0] sm:$0xff]
  %v20 = vld [vmem:[%s0 + $0x8] sm:$0xff]
  %v21 = vld [vmem:[%s0 + $0x10] sm:$0xff]
  %v22 = vld [vmem:[%s0 + $0x18] sm:$0xff]
  %v23 = vld [vmem:[%s0 + $0x20] sm:$0xff]
  %v24 = vld [vmem:[%s0 + $0x28] sm:$0xff]
  %v25 = vld [vmem:[%s0 + $0x30] sm:$0xff]
  %v26 = vld [vmem:[%s0 + $0x38] sm:$0xff]
  %v27 = vld [vmem:[%s0 + $0x40] sm:$0xff]
  %v28 = vld [vmem:[%s0 + $0x48] sm:$0xff]
  %v29 = vld [vmem:[%s0 + $0x50] sm:$0xff]
  %v30 = vld [vmem:[%s0 + $0x58] sm:$0xff]
  %v31 = vld [vmem:[%s0 + $0x60] sm:$0xff]
  %v32 = vld [vmem:[%s0 + $0x68] sm:$0xff]
  %v33 = vld [vmem:[%s0 + $0x70] sm:$0xff]
  %v34 = vld [vmem:[%s0 + $0x78] sm:$0xff]
  %36 = vset.pattern.permute.xlu0 2
  %37 = vperm.xlu0 %36, %v11
  %v38 = vpop.permute.xlu0 %37
  %vm40 = vcmask 15360
  %v41 = vsel %vm40, %v11, 0
  %v44 = vsel %vm40, %v19, 0
  %v47 = vsel %vm40, %v20, 0
  %v50 = vsel %vm40, %v21, 0
  %v53 = vsel %vm40, %v22, 0
  %v56 = vsel %vm40, %v23, 0
  %v59 = vsel %vm40, %v24, 0
  %v62 = vsel %vm40, %v25, 0
  %v65 = vsel %vm40, %v26, 0
  %v68 = vsel %vm40, %v27, 0
  %v71 = vsel %vm40, %v28, 0
  %v74 = vsel %vm40, %v29, 0
  %v77 = vsel %vm40, %v30, 0
  %v80 = vsel %vm40, %v31, 0
  %v83 = vsel %vm40, %v32, 0
  %v86 = vsel %vm40, %v33, 0
  %v89 = vsel %vm40, %v34, 0
  %91 = vmatprep.subr.mxu0 0.0
  %92 = vmatpush1.xpose.msra.mxu0 %v44
  %93 = vmatprep.subr.mxu0 0.0
  %94 = vmatpush1.xpose.msra.mxu0 %v47
  %95 = vmatprep.subr.mxu0 0.0
  %96 = vmatpush1.xpose.msra.mxu0 %v50
  %97 = vmatprep.subr.mxu0 0.0
  %98 = vmatpush1.xpose.msra.mxu0 %v53
  %99 = vmatprep.subr.mxu0 0.0
  %100 = vmatpush1.xpose.msra.mxu0 %v56
  %101 = vmatprep.subr.mxu0 0.0
  %102 = vmatpush1.xpose.msra.mxu0 %v59
  %103 = vmatprep.subr.mxu0 0.0
  %104 = vmatpush1.xpose.msra.mxu0 %v62
  %105 = vmatprep.subr.mxu0 0.0
  %106 = vmatpush1.xpose.msra.mxu0 %v65
  %107 = vmatprep.subr.mxu0 0.0
  %108 = vmatpush1.xpose.msra.mxu0 %v68
  %109 = vmatprep.subr.mxu0 0.0
  %110 = vmatpush1.xpose.msra.mxu0 %v71
  %111 = vmatprep.subr.mxu0 0.0
  %112 = vmatpush1.xpose.msra.mxu0 %v74
  %113 = vmatprep.subr.mxu0 0.0
  %114 = vmatpush1.xpose.msra.mxu0 %v77
  %115 = vmatprep.subr.mxu0 0.0
  %116 = vmatpush1.xpose.msra.mxu0 %v80
  %117 = vmatprep.subr.mxu0 0.0
  %118 = vmatpush1.xpose.msra.mxu0 %v83
  %119 = vmatprep.subr.mxu0 0.0
  %120 = vmatpush1.xpose.msra.mxu0 %v86
  %121 = vmatprep.subr.mxu0 0.0
  %122 = vmatpush1.xpose.msra.mxu0 %v89
  %123 = vmatprep.subr.mxu0 0.0
  %124 = vmatpush1.xpose.msra.mxu0 0.0
  %125 = vmatprep.subr.mxu0 0.0
  %126 = vmatpush1.xpose.msra.mxu0 0.0
  %127 = vmatprep.subr.mxu0 0.0
  %128 = vmatpush1.xpose.msra.mxu0 0.0
  %129 = vmatprep.subr.mxu0 0.0
  %130 = vmatpush1.xpose.msra.mxu0 0.0
  %131 = vmatprep.subr.mxu0 0.0
  %132 = vmatpush1.xpose.msra.mxu0 0.0
  %133 = vmatprep.subr.mxu0 0.0
  %134 = vmatpush1.xpose.msra.mxu0 0.0
  %135 = vmatprep.subr.mxu0 0.0
  %136 = vmatpush1.xpose.msra.mxu0 0.0
  %137 = vmatprep.subr.mxu0 0.0
  %138 = vmatpush1.xpose.msra.mxu0 0.0
  %139 = vmatprep.subr.mxu0 0.0
  %140 = vmatpush1.xpose.msra.mxu0 0.0
  %141 = vmatprep.subr.mxu0 0.0
  %142 = vmatpush1.xpose.msra.mxu0 0.0
  %143 = vmatprep.subr.mxu0 0.0
  %144 = vmatpush1.xpose.msra.mxu0 0.0
  %145 = vmatprep.subr.mxu0 0.0
  %146 = vmatpush1.xpose.msra.mxu0 0.0
  %147 = vmatprep.subr.mxu0 0.0
  %148 = vmatpush1.xpose.msra.mxu0 0.0
  %149 = vmatprep.subr.mxu0 0.0
  %150 = vmatpush1.xpose.msra.mxu0 0.0
  %151 = vmatprep.subr.mxu0 0.0
  %152 = vmatpush1.xpose.msra.mxu0 0.0
  %153 = vmatprep.subr.mxu0 0.0
  %154 = vmatpush1.xpose.msra.mxu0 0.0
  %155 = vmatprep.mubr.f32.mxu0 0.0
  %156 = vmatmul.mubr.f32.gmra.mrb[0].mxu0 %v41
  %v157 = vpop.f32.mrb[0].mxu0
  %v158 = vadd.f32 %v38, %v157
  %v159 = vpop.f32.mrb[0].mxu0
  %160 = vdwg.mxu0
  %v161 = vtanh.pop %v158
  %163 = vset.pattern.permute.xlu0 8
  %164 = vperm.xlu0 %163, %v12
  %v165 = vpop.permute.xlu0 %164
  %vm167 = vcmask 64512
  %v168 = vsel %vm167, %v12, 0
  %170 = vmatprep.subr.mxu0 0.0
  %171 = vmatpush1.msra.mxu0 %v161
  %172 = vmatprep.subr.mxu0 0.0
  %173 = vmatpush1.msra.mxu0 0.0
  %174 = vmatprep.subr.mxu0 0.0
  %175 = vmatpush1.msra.mxu0 0.0
  %176 = vmatprep.subr.mxu0 0.0
  %177 = vmatpush1.msra.mxu0 0.0
  %178 = vmatprep.subr.mxu0 0.0
  %179 = vmatpush1.msra.mxu0 0.0
  %180 = vmatprep.subr.mxu0 0.0
  %181 = vmatpush1.msra.mxu0 0.0
  %182 = vmatprep.subr.mxu0 0.0
  %183 = vmatpush1.msra.mxu0 0.0
  %184 = vmatprep.subr.mxu0 0.0
  %185 = vmatpush1.msra.mxu0 0.0
  %186 = vmatprep.subr.mxu0 0.0
  %187 = vmatpush1.msra.mxu0 0.0
  %188 = vmatprep.subr.mxu0 0.0
  %189 = vmatpush1.msra.mxu0 0.0
  %190 = vmatprep.subr.mxu0 0.0
  %191 = vmatpush1.msra.mxu0 0.0
  %192 = vmatprep.subr.mxu0 0.0
  %193 = vmatpush1.msra.mxu0 0.0
  %194 = vmatprep.subr.mxu0 0.0
  %195 = vmatpush1.msra.mxu0 0.0
  %196 = vmatprep.subr.mxu0 0.0
  %197 = vmatpush1.msra.mxu0 0.0
  %198 = vmatprep.subr.mxu0 0.0
  %199 = vmatpush1.msra.mxu0 0.0
  %200 = vmatprep.subr.mxu0 0.0
  %201 = vmatpush1.msra.mxu0 0.0
  %202 = vmatprep.subr.mxu0 0.0
  %203 = vmatpush1.msra.mxu0 0.0
  %204 = vmatprep.subr.mxu0 0.0
  %205 = vmatpush1.msra.mxu0 0.0
  %206 = vmatprep.subr.mxu0 0.0
  %207 = vmatpush1.msra.mxu0 0.0
  %208 = vmatprep.subr.mxu0 0.0
  %209 = vmatpush1.msra.mxu0 0.0
  %210 = vmatprep.subr.mxu0 0.0
  %211 = vmatpush1.msra.mxu0 0.0
  %212 = vmatprep.subr.mxu0 0.0
  %213 = vmatpush1.msra.mxu0 0.0
  %214 = vmatprep.subr.mxu0 0.0
  %215 = vmatpush1.msra.mxu0 0.0
  %216 = vmatprep.subr.mxu0 0.0
  %217 = vmatpush1.msra.mxu0 0.0
  %218 = vmatprep.subr.mxu0 0.0
  %219 = vmatpush1.msra.mxu0 0.0
  %220 = vmatprep.subr.mxu0 0.0
  %221 = vmatpush1.msra.mxu0 0.0
  %222 = vmatprep.subr.mxu0 0.0
  %223 = vmatpush1.msra.mxu0 0.0
  %224 = vmatprep.subr.mxu0 0.0
  %225 = vmatpush1.msra.mxu0 0.0
  %226 = vmatprep.subr.mxu0 0.0
  %227 = vmatpush1.msra.mxu0 0.0
  %228 = vmatprep.subr.mxu0 0.0
  %229 = vmatpush1.msra.mxu0 0.0
  %230 = vmatprep.subr.mxu0 0.0
  %231 = vmatpush1.msra.mxu0 0.0
  %232 = vmatprep.subr.mxu0 0.0
  %233 = vmatpush1.msra.mxu0 0.0
  %234 = vmatprep.mubr.f32.mxu0 0.0
  %235 = vmatmul.mubr.f32.gmra.mrb[0].mxu0 %v168
  %v236 = vpop.f32.mrb[0].mxu0
  %v237 = vadd.f32 %v165, %v236
  %v238 = vpop.f32.mrb[0].mxu0
  %239 = vdwg.mxu0
  %v240 = vtanh.pop %v237
  %242 = vset.pattern.permute.xlu0 8
  %243 = vperm.xlu0 %242, %v13
  %v244 = vpop.permute.xlu0 %243
  %v246 = vsel %vm167, %v13, 0
  %248 = vmatprep.subr.mxu0 0.0
  %249 = vmatpush1.msra.mxu0 %v240
  %250 = vmatprep.subr.mxu0 0.0
  %251 = vmatpush1.msra.mxu0 0.0
  %252 = vmatprep.subr.mxu0 0.0
  %253 = vmatpush1.msra.mxu0 0.0
  %254 = vmatprep.subr.mxu0 0.0
  %255 = vmatpush1.msra.mxu0 0.0
  %256 = vmatprep.subr.mxu0 0.0
  %257 = vmatpush1.msra.mxu0 0.0
  %258 = vmatprep.subr.mxu0 0.0
  %259 = vmatpush1.msra.mxu0 0.0
  %260 = vmatprep.subr.mxu0 0.0
  %261 = vmatpush1.msra.mxu0 0.0
  %262 = vmatprep.subr.mxu0 0.0
  %263 = vmatpush1.msra.mxu0 0.0
  %264 = vmatprep.subr.mxu0 0.0
  %265 = vmatpush1.msra.mxu0 0.0
  %266 = vmatprep.subr.mxu0 0.0
  %267 = vmatpush1.msra.mxu0 0.0
  %268 = vmatprep.subr.mxu0 0.0
  %269 = vmatpush1.msra.mxu0 0.0
  %270 = vmatprep.subr.mxu0 0.0
  %271 = vmatpush1.msra.mxu0 0.0
  %272 = vmatprep.subr.mxu0 0.0
  %273 = vmatpush1.msra.mxu0 0.0
  %274 = vmatprep.subr.mxu0 0.0
  %275 = vmatpush1.msra.mxu0 0.0
  %276 = vmatprep.subr.mxu0 0.0
  %277 = vmatpush1.msra.mxu0 0.0
  %278 = vmatprep.subr.mxu0 0.0
  %279 = vmatpush1.msra.mxu0 0.0
  %280 = vmatprep.subr.mxu0 0.0
  %281 = vmatpush1.msra.mxu0 0.0
  %282 = vmatprep.subr.mxu0 0.0
  %283 = vmatpush1.msra.mxu0 0.0
  %284 = vmatprep.subr.mxu0 0.0
  %285 = vmatpush1.msra.mxu0 0.0
  %286 = vmatprep.subr.mxu0 0.0
  %287 = vmatpush1.msra.mxu0 0.0
  %288 = vmatprep.subr.mxu0 0.0
  %289 = vmatpush1.msra.mxu0 0.0
  %290 = vmatprep.subr.mxu0 0.0
  %291 = vmatpush1.msra.mxu0 0.0
  %292 = vmatprep.subr.mxu0 0.0
  %293 = vmatpush1.msra.mxu0 0.0
  %294 = vmatprep.subr.mxu0 0.0
  %295 = vmatpush1.msra.mxu0 0.0
  %296 = vmatprep.subr.mxu0 0.0
  %297 = vmatpush1.msra.mxu0 0.0
  %298 = vmatprep.subr.mxu0 0.0
  %299 = vmatpush1.msra.mxu0 0.0
  %300 = vmatprep.subr.mxu0 0.0
  %301 = vmatpush1.msra.mxu0 0.0
  %302 = vmatprep.subr.mxu0 0.0
  %303 = vmatpush1.msra.mxu0 0.0
  %304 = vmatprep.subr.mxu0 0.0
  %305 = vmatpush1.msra.mxu0 0.0
  %306 = vmatprep.subr.mxu0 0.0
  %307 = vmatpush1.msra.mxu0 0.0
  %308 = vmatprep.subr.mxu0 0.0
  %309 = vmatpush1.msra.mxu0 0.0
  %310 = vmatprep.subr.mxu0 0.0
  %311 = vmatpush1.msra.mxu0 0.0
  %312 = vmatprep.mubr.f32.mxu0 0.0
  %313 = vmatmul.mubr.f32.gmra.mrb[0].mxu0 %v246
  %v314 = vpop.f32.mrb[0].mxu0
  %v315 = vadd.f32 %v244, %v314
  %v316 = vpop.f32.mrb[0].mxu0
  %317 = vdwg.mxu0
  %320 = vrot.lane.b32.xlu0 %v14, 126
  %v321 = vpop.permute.xlu0 %320
  %322 = vrot.lane.b32.xlu0 %v15, 126
  %v323 = vpop.permute.xlu0 %322
  %v324 = vsel %vm167, %v321, 0
  %v326 = vsel %vm167, %v323, 0
  %328 = vmatprep.subr.mxu0 0.0
  %329 = vmatpush1.msra.mxu0 %v315
  %330 = vmatprep.subr.mxu0 0.0
  %331 = vmatpush1.msra.mxu0 0.0
  %332 = vmatprep.subr.mxu0 0.0
  %333 = vmatpush1.msra.mxu0 0.0
  %334 = vmatprep.subr.mxu0 0.0
  %335 = vmatpush1.msra.mxu0 0.0
  %336 = vmatprep.subr.mxu0 0.0
  %337 = vmatpush1.msra.mxu0 0.0
  %338 = vmatprep.subr.mxu0 0.0
  %339 = vmatpush1.msra.mxu0 0.0
  %340 = vmatprep.subr.mxu0 0.0
  %341 = vmatpush1.msra.mxu0 0.0
  %342 = vmatprep.subr.mxu0 0.0
  %343 = vmatpush1.msra.mxu0 0.0
  %344 = vmatprep.subr.mxu0 0.0
  %345 = vmatpush1.msra.mxu0 0.0
  %346 = vmatprep.subr.mxu0 0.0
  %347 = vmatpush1.msra.mxu0 0.0
  %348 = vmatprep.subr.mxu0 0.0
  %349 = vmatpush1.msra.mxu0 0.0
  %350 = vmatprep.subr.mxu0 0.0
  %351 = vmatpush1.msra.mxu0 0.0
  %352 = vmatprep.subr.mxu0 0.0
  %353 = vmatpush1.msra.mxu0 0.0
  %354 = vmatprep.subr.mxu0 0.0
  %355 = vmatpush1.msra.mxu0 0.0
  %356 = vmatprep.subr.mxu0 0.0
  %357 = vmatpush1.msra.mxu0 0.0
  %358 = vmatprep.subr.mxu0 0.0
  %359 = vmatpush1.msra.mxu0 0.0
  %360 = vmatprep.subr.mxu0 0.0
  %361 = vmatpush1.msra.mxu0 0.0
  %362 = vmatprep.subr.mxu0 0.0
  %363 = vmatpush1.msra.mxu0 0.0
  %364 = vmatprep.subr.mxu0 0.0
  %365 = vmatpush1.msra.mxu0 0.0
  %366 = vmatprep.subr.mxu0 0.0
  %367 = vmatpush1.msra.mxu0 0.0
  %368 = vmatprep.subr.mxu0 0.0
  %369 = vmatpush1.msra.mxu0 0.0
  %370 = vmatprep.subr.mxu0 0.0
  %371 = vmatpush1.msra.mxu0 0.0
  %372 = vmatprep.subr.mxu0 0.0
  %373 = vmatpush1.msra.mxu0 0.0
  %374 = vmatprep.subr.mxu0 0.0
  %375 = vmatpush1.msra.mxu0 0.0
  %376 = vmatprep.subr.mxu0 0.0
  %377 = vmatpush1.msra.mxu0 0.0
  %378 = vmatprep.subr.mxu0 0.0
  %379 = vmatpush1.msra.mxu0 0.0
  %380 = vmatprep.subr.mxu0 0.0
  %381 = vmatpush1.msra.mxu0 0.0
  %382 = vmatprep.subr.mxu0 0.0
  %383 = vmatpush1.msra.mxu0 0.0
  %384 = vmatprep.subr.mxu0 0.0
  %385 = vmatpush1.msra.mxu0 0.0
  %386 = vmatprep.subr.mxu0 0.0
  %387 = vmatpush1.msra.mxu0 0.0
  %388 = vmatprep.subr.mxu0 0.0
  %389 = vmatpush1.msra.mxu0 0.0
  %390 = vmatprep.subr.mxu0 0.0
  %391 = vmatpush1.msra.mxu0 0.0
  %392 = vmatprep.mubr.f32.mxu0 0.0
  %393 = vmatmul.mubr.f32.gmra.mrb[0].mxu0 %v324
  %v394 = vpop.f32.mrb[0].mxu0
  %v395 = vadd.f32 0.0, %v394
  %v396 = vpop.f32.mrb[0].mxu0
  %397 = vmatprep.mubr.f32.mxu0 0.0
  %398 = vmatmul.mubr.f32.gmra.mrb[0].mxu0 %v326
  %v399 = vpop.f32.mrb[0].mxu0
  %v400 = vadd.f32 0.0, %v399
  %v401 = vpop.f32.mrb[0].mxu0
  %402 = vdwg.mxu0
  %v403 = vsel %vm40, %v14, 0
  %v405 = vsel %vm40, %v15, 0
  %407 = vmatprep.subr.mxu0 0.0
  %408 = vmatpush1.xpose.msra.mxu0 %v44
  %409 = vmatprep.subr.mxu0 0.0
  %410 = vmatpush1.xpose.msra.mxu0 %v47
  %411 = vmatprep.subr.mxu0 0.0
  %412 = vmatpush1.xpose.msra.mxu0 %v50
  %413 = vmatprep.subr.mxu0 0.0
  %414 = vmatpush1.xpose.msra.mxu0 %v53
  %415 = vmatprep.subr.mxu0 0.0
  %416 = vmatpush1.xpose.msra.mxu0 %v56
  %417 = vmatprep.subr.mxu0 0.0
  %418 = vmatpush1.xpose.msra.mxu0 %v59
  %419 = vmatprep.subr.mxu0 0.0
  %420 = vmatpush1.xpose.msra.mxu0 %v62
  %421 = vmatprep.subr.mxu0 0.0
  %422 = vmatpush1.xpose.msra.mxu0 %v65
  %423 = vmatprep.subr.mxu0 0.0
  %424 = vmatpush1.xpose.msra.mxu0 %v68
  %425 = vmatprep.subr.mxu0 0.0
  %426 = vmatpush1.xpose.msra.mxu0 %v71
  %427 = vmatprep.subr.mxu0 0.0
  %428 = vmatpush1.xpose.msra.mxu0 %v74
  %429 = vmatprep.subr.mxu0 0.0
  %430 = vmatpush1.xpose.msra.mxu0 %v77
  %431 = vmatprep.subr.mxu0 0.0
  %432 = vmatpush1.xpose.msra.mxu0 %v80
  %433 = vmatprep.subr.mxu0 0.0
  %434 = vmatpush1.xpose.msra.mxu0 %v83
  %435 = vmatprep.subr.mxu0 0.0
  %436 = vmatpush1.xpose.msra.mxu0 %v86
  %437 = vmatprep.subr.mxu0 0.0
  %438 = vmatpush1.xpose.msra.mxu0 %v89
  %439 = vmatprep.subr.mxu0 0.0
  %440 = vmatpush1.xpose.msra.mxu0 0.0
  %441 = vmatprep.subr.mxu0 0.0
  %442 = vmatpush1.xpose.msra.mxu0 0.0
  %443 = vmatprep.subr.mxu0 0.0
  %444 = vmatpush1.xpose.msra.mxu0 0.0
  %445 = vmatprep.subr.mxu0 0.0
  %446 = vmatpush1.xpose.msra.mxu0 0.0
  %447 = vmatprep.subr.mxu0 0.0
  %448 = vmatpush1.xpose.msra.mxu0 0.0
  %449 = vmatprep.subr.mxu0 0.0
  %450 = vmatpush1.xpose.msra.mxu0 0.0
  %451 = vmatprep.subr.mxu0 0.0
  %452 = vmatpush1.xpose.msra.mxu0 0.0
  %453 = vmatprep.subr.mxu0 0.0
  %454 = vmatpush1.xpose.msra.mxu0 0.0
  %455 = vmatprep.subr.mxu0 0.0
  %456 = vmatpush1.xpose.msra.mxu0 0.0
  %457 = vmatprep.subr.mxu0 0.0
  %458 = vmatpush1.xpose.msra.mxu0 0.0
  %459 = vmatprep.subr.mxu0 0.0
  %460 = vmatpush1.xpose.msra.mxu0 0.0
  %461 = vmatprep.subr.mxu0 0.0
  %462 = vmatpush1.xpose.msra.mxu0 0.0
  %463 = vmatprep.subr.mxu0 0.0
  %464 = vmatpush1.xpose.msra.mxu0 0.0
  %465 = vmatprep.subr.mxu0 0.0
  %466 = vmatpush1.xpose.msra.mxu0 0.0
  %467 = vmatprep.subr.mxu0 0.0
  %468 = vmatpush1.xpose.msra.mxu0 0.0
  %469 = vmatprep.subr.mxu0 0.0
  %470 = vmatpush1.xpose.msra.mxu0 0.0
  %471 = vmatprep.mubr.f32.mxu0 0.0
  %472 = vmatmul.mubr.f32.gmra.mrb[0].mxu0 %v403
  %v473 = vpop.f32.mrb[0].mxu0
  %v474 = vadd.f32 %v395, %v473
  %v475 = vpop.f32.mrb[0].mxu0
  %476 = vmatprep.mubr.f32.mxu0 0.0
  %477 = vmatmul.mubr.f32.gmra.mrb[0].mxu0 %v405
  %v478 = vpop.f32.mrb[0].mxu0
  %v479 = vadd.f32 %v400, %v478
  %v480 = vpop.f32.mrb[0].mxu0
  %481 = vdwg.mxu0
  %482 = vset.pattern.permute.xlu0 10
  %483 = vperm.xlu0 %482, %v14
  %v484 = vpop.permute.xlu0 %483
  %486 = vset.pattern.permute.xlu0 10
  %487 = vperm.xlu0 %486, %v15
  %v488 = vpop.permute.xlu0 %487
  %v490 = vadd.f32 %v474, %v484
  %v491 = vadd.f32 %v479, %v488
  %v492 = vtanh.pop %v490
  %v493 = vtanh.pop %v491
  %495 = vset.pattern.permute.xlu0 10
  %496 = vperm.xlu0 %495, %v16
  %v497 = vpop.permute.xlu0 %496
  %500 = vset.pattern.permute.xlu0 10
  %501 = vperm.xlu0 %500, %v17
  %v502 = vpop.permute.xlu0 %501
  %vm504 = vcmask 80896
  %v505 = vsel %vm504, %v16, 0
  %v507 = vsel %vm504, %v17, 0
  %vm509 = vcmask 1041408
  %v511 = vsel %vm509, %v493, 0
  %513 = vmatprep.subr.mxu0 0.0
  %514 = vmatpush1.msra.mxu0 %v492
  %515 = vmatprep.subr.mxu0 0.0
  %516 = vmatpush1.msra.mxu0 %v511
  %517 = vmatprep.subr.mxu0 0.0
  %518 = vmatpush1.msra.mxu0 0.0
  %519 = vmatprep.subr.mxu0 0.0
  %520 = vmatpush1.msra.mxu0 0.0
  %521 = vmatprep.subr.mxu0 0.0
  %522 = vmatpush1.msra.mxu0 0.0
  %523 = vmatprep.subr.mxu0 0.0
  %524 = vmatpush1.msra.mxu0 0.0
  %525 = vmatprep.subr.mxu0 0.0
  %526 = vmatpush1.msra.mxu0 0.0
  %527 = vmatprep.subr.mxu0 0.0
  %528 = vmatpush1.msra.mxu0 0.0
  %529 = vmatprep.subr.mxu0 0.0
  %530 = vmatpush1.msra.mxu0 0.0
  %531 = vmatprep.subr.mxu0 0.0
  %532 = vmatpush1.msra.mxu0 0.0
  %533 = vmatprep.subr.mxu0 0.0
  %534 = vmatpush1.msra.mxu0 0.0
  %535 = vmatprep.subr.mxu0 0.0
  %536 = vmatpush1.msra.mxu0 0.0
  %537 = vmatprep.subr.mxu0 0.0
  %538 = vmatpush1.msra.mxu0 0.0
  %539 = vmatprep.subr.mxu0 0.0
  %540 = vmatpush1.msra.mxu0 0.0
  %541 = vmatprep.subr.mxu0 0.0
  %542 = vmatpush1.msra.mxu0 0.0
  %543 = vmatprep.subr.mxu0 0.0
  %544 = vmatpush1.msra.mxu0 0.0
  %545 = vmatprep.subr.mxu0 0.0
  %546 = vmatpush1.msra.mxu0 0.0
  %547 = vmatprep.subr.mxu0 0.0
  %548 = vmatpush1.msra.mxu0 0.0
  %549 = vmatprep.subr.mxu0 0.0
  %550 = vmatpush1.msra.mxu0 0.0
  %551 = vmatprep.subr.mxu0 0.0
  %552 = vmatpush1.msra.mxu0 0.0
  %553 = vmatprep.subr.mxu0 0.0
  %554 = vmatpush1.msra.mxu0 0.0
  %555 = vmatprep.subr.mxu0 0.0
  %556 = vmatpush1.msra.mxu0 0.0
  %557 = vmatprep.subr.mxu0 0.0
  %558 = vmatpush1.msra.mxu0 0.0
  %559 = vmatprep.subr.mxu0 0.0
  %560 = vmatpush1.msra.mxu0 0.0
  %561 = vmatprep.subr.mxu0 0.0
  %562 = vmatpush1.msra.mxu0 0.0
  %563 = vmatprep.subr.mxu0 0.0
  %564 = vmatpush1.msra.mxu0 0.0
  %565 = vmatprep.subr.mxu0 0.0
  %566 = vmatpush1.msra.mxu0 0.0
  %567 = vmatprep.subr.mxu0 0.0
  %568 = vmatpush1.msra.mxu0 0.0
  %569 = vmatprep.subr.mxu0 0.0
  %570 = vmatpush1.msra.mxu0 0.0
  %571 = vmatprep.subr.mxu0 0.0
  %572 = vmatpush1.msra.mxu0 0.0
  %573 = vmatprep.subr.mxu0 0.0
  %574 = vmatpush1.msra.mxu0 0.0
  %575 = vmatprep.subr.mxu0 0.0
  %576 = vmatpush1.msra.mxu0 0.0
  %577 = vmatprep.mubr.f32.mxu0 0.0
  %578 = vmatmul.mubr.f32.gmra.mrb[0].mxu0 %v505
  %v579 = vpop.f32.mrb[0].mxu0
  %v580 = vadd.f32 %v497, %v579
  %v581 = vpop.f32.mrb[0].mxu0
  %582 = vmatprep.mubr.f32.mxu0 0.0
  %583 = vmatmul.mubr.f32.gmra.mrb[0].mxu0 %v507
  %v584 = vpop.f32.mrb[0].mxu0
  %v585 = vadd.f32 %v502, %v584
  %v586 = vpop.f32.mrb[0].mxu0
  %587 = vdwg.mxu0
  %v588 = vtanh.pop %v580
  %v589 = vtanh.pop %v585
  %591 = vset.pattern.permute.xlu0 10
  %592 = vperm.xlu0 %591, %v18
  %v593 = vpop.permute.xlu0 %592
  %v595 = vsel %vm504, %v18, 0
  %v598 = vsel %vm509, %v589, 0
  %600 = vmatprep.subr.mxu0 0.0
  %601 = vmatpush1.msra.mxu0 %v588
  %602 = vmatprep.subr.mxu0 0.0
  %603 = vmatpush1.msra.mxu0 %v598
  %604 = vmatprep.subr.mxu0 0.0
  %605 = vmatpush1.msra.mxu0 0.0
  %606 = vmatprep.subr.mxu0 0.0
  %607 = vmatpush1.msra.mxu0 0.0
  %608 = vmatprep.subr.mxu0 0.0
  %609 = vmatpush1.msra.mxu0 0.0
  %610 = vmatprep.subr.mxu0 0.0
  %611 = vmatpush1.msra.mxu0 0.0
  %612 = vmatprep.subr.mxu0 0.0
  %613 = vmatpush1.msra.mxu0 0.0
  %614 = vmatprep.subr.mxu0 0.0
  %615 = vmatpush1.msra.mxu0 0.0
  %616 = vmatprep.subr.mxu0 0.0
  %617 = vmatpush1.msra.mxu0 0.0
  %618 = vmatprep.subr.mxu0 0.0
  %619 = vmatpush1.msra.mxu0 0.0
  %620 = vmatprep.subr.mxu0 0.0
  %621 = vmatpush1.msra.mxu0 0.0
  %622 = vmatprep.subr.mxu0 0.0
  %623 = vmatpush1.msra.mxu0 0.0
  %624 = vmatprep.subr.mxu0 0.0
  %625 = vmatpush1.msra.mxu0 0.0
  %626 = vmatprep.subr.mxu0 0.0
  %627 = vmatpush1.msra.mxu0 0.0
  %628 = vmatprep.subr.mxu0 0.0
  %629 = vmatpush1.msra.mxu0 0.0
  %630 = vmatprep.subr.mxu0 0.0
  %631 = vmatpush1.msra.mxu0 0.0
  %632 = vmatprep.subr.mxu0 0.0
  %633 = vmatpush1.msra.mxu0 0.0
  %634 = vmatprep.subr.mxu0 0.0
  %635 = vmatpush1.msra.mxu0 0.0
  %636 = vmatprep.subr.mxu0 0.0
  %637 = vmatpush1.msra.mxu0 0.0
  %638 = vmatprep.subr.mxu0 0.0
  %639 = vmatpush1.msra.mxu0 0.0
  %640 = vmatprep.subr.mxu0 0.0
  %641 = vmatpush1.msra.mxu0 0.0
  %642 = vmatprep.subr.mxu0 0.0
  %643 = vmatpush1.msra.mxu0 0.0
  %644 = vmatprep.subr.mxu0 0.0
  %645 = vmatpush1.msra.mxu0 0.0
  %646 = vmatprep.subr.mxu0 0.0
  %647 = vmatpush1.msra.mxu0 0.0
  %648 = vmatprep.subr.mxu0 0.0
  %649 = vmatpush1.msra.mxu0 0.0
  %650 = vmatprep.subr.mxu0 0.0
  %651 = vmatpush1.msra.mxu0 0.0
  %652 = vmatprep.subr.mxu0 0.0
  %653 = vmatpush1.msra.mxu0 0.0
  %654 = vmatprep.subr.mxu0 0.0
  %655 = vmatpush1.msra.mxu0 0.0
  %656 = vmatprep.subr.mxu0 0.0
  %657 = vmatpush1.msra.mxu0 0.0
  %658 = vmatprep.subr.mxu0 0.0
  %659 = vmatpush1.msra.mxu0 0.0
  %660 = vmatprep.subr.mxu0 0.0
  %661 = vmatpush1.msra.mxu0 0.0
  %662 = vmatprep.subr.mxu0 0.0
  %663 = vmatpush1.msra.mxu0 0.0
  %664 = vmatprep.mubr.f32.mxu0 0.0
  %665 = vmatmul.mubr.f32.gmra.mrb[0].mxu0 %v595
  %v666 = vpop.f32.mrb[0].mxu0
  %v667 = vadd.f32 %v593, %v666
  %v668 = vpop.f32.mrb[0].mxu0
  %669 = vdwg.mxu0
  %670 = vxpose.xlu0.b32.start [1/16] %v667, 128
  %671 = vxpose.xlu0.b32.cont [2/16] 0.0, 128
  %672 = vxpose.xlu0.b32.cont [3/16] 0.0, 128
  %673 = vxpose.xlu0.b32.cont [4/16] 0.0, 128
  %674 = vxpose.xlu0.b32.cont [5/16] 0.0, 128
  %675 = vxpose.xlu0.b32.cont [6/16] 0.0, 128
  %676 = vxpose.xlu0.b32.cont [7/16] 0.0, 128
  %677 = vxpose.xlu0.b32.cont [8/16] 0.0, 128
  %678 = vxpose.xlu0.b32.cont [9/16] 0.0, 128
  %679 = vxpose.xlu0.b32.cont [10/16] 0.0, 128
  %680 = vxpose.xlu0.b32.cont [11/16] 0.0, 128
  %681 = vxpose.xlu0.b32.cont [12/16] 0.0, 128
  %682 = vxpose.xlu0.b32.cont [13/16] 0.0, 128
  %683 = vxpose.xlu0.b32.cont [14/16] 0.0, 128
  %684 = vxpose.xlu0.b32.cont [15/16] 0.0, 128
  %685 = vxpose.xlu0.b32.end [16/16] 0.0, 128
  %v686 = vpop.trf.xlu0
  %v687 = vpop.trf.xlu0
  %v688 = vpop.trf.xlu0
  %v689 = vpop.trf.xlu0
  %v690 = vpop.trf.xlu0
  %v691 = vpop.trf.xlu0
  %v692 = vpop.trf.xlu0
  %v693 = vpop.trf.xlu0
  %v694 = vpop.trf.xlu0
  %v695 = vpop.trf.xlu0
  %v696 = vpop.trf.xlu0
  %v697 = vpop.trf.xlu0
  %v698 = vpop.trf.xlu0
  %v699 = vpop.trf.xlu0
  %v700 = vpop.trf.xlu0
  %v701 = vpop.trf.xlu0
  %702 = vst.msk [vmem:[%s2] sm:$0xff] %vm40, %v686
  %703 = vst.msk [vmem:[%s2 + $0x8] sm:$0xff] %vm40, %v687
  %704 = vst.msk [vmem:[%s2 + $0x10] sm:$0xff] %vm40, %v688
  %705 = vst.msk [vmem:[%s2 + $0x18] sm:$0xff] %vm40, %v689
  %706 = vst.msk [vmem:[%s2 + $0x20] sm:$0xff] %vm40, %v690
  %707 = vst.msk [vmem:[%s2 + $0x28] sm:$0xff] %vm40, %v691
  %708 = vst.msk [vmem:[%s2 + $0x30] sm:$0xff] %vm40, %v692
  %709 = vst.msk [vmem:[%s2 + $0x38] sm:$0xff] %vm40, %v693
  %710 = vst.msk [vmem:[%s2 + $0x40] sm:$0xff] %vm40, %v694
  %711 = vst.msk [vmem:[%s2 + $0x48] sm:$0xff] %vm40, %v695
  %712 = vst.msk [vmem:[%s2 + $0x50] sm:$0xff] %vm40, %v696
  %713 = vst.msk [vmem:[%s2 + $0x58] sm:$0xff] %vm40, %v697
  %714 = vst.msk [vmem:[%s2 + $0x60] sm:$0xff] %vm40, %v698
  %715 = vst.msk [vmem:[%s2 + $0x68] sm:$0xff] %vm40, %v699
  %716 = vst.msk [vmem:[%s2 + $0x70] sm:$0xff] %vm40, %v700
  %717 = vst.msk [vmem:[%s2 + $0x78] sm:$0xff] %vm40, %v701
  // Predicated region
  $region10: #{tpu_custom_call.1} parent=0 // pred_check
    _
  $region11: #{tpu_custom_call.1} parent=0 // pred_check_branch
    %719 = sbr.rel (0) target = $region13
  $region12: #{tpu_custom_call.1} parent=0 // pred_region
    _
  $region13: #{tpu_custom_call.1} parent=0 // pred_fallthru
    _
  // Predicated region
  $region14: #{tpu_custom_call.1} parent=0 // pred_check
    _
  $region15: #{tpu_custom_call.1} parent=0 // pred_check_branch
    %721 = sbr.rel (0) target = $region17
  $region16: #{tpu_custom_call.1} parent=0 // pred_region
    _
  $region17: #{tpu_custom_call.1} parent=0 // pred_fallthru
    _

</llo_original>
